<compile_context>
chip_gen: v6e
topology: v6e:2x2x1
jax: 0.10.0
libtpu: 0.0.40
codegen_flags: <defaults>
</compile_context>

<pallas_src>
import jax
import jax.numpy as jnp
from jax.experimental import pallas as pl
from jax.experimental.pallas import tpu as pltpu


# ----------------------------------------------------------------------------
# Kernel 1: per-channel sum / sum-of-squares of Y = X @ W^T + b (no Y output).
# Grid = (num_cores, row_tiles_per_core); stats blocks are per-core resident
# accumulators (same block index across the sequential row-tile axis).
# ----------------------------------------------------------------------------
def _conv_stats_kernel(x_ref, wt_ref, b_ref, sum_ref, sq_ref):
    i = pl.program_id(1)

    y = jnp.dot(x_ref[...], wt_ref[...], preferred_element_type=jnp.float32)
    y = y + b_ref[...]                                   # (tm, Cout) + (1, Cout)

    @pl.when(i == 0)
    def _():
        sum_ref[...] = jnp.zeros_like(sum_ref)
        sq_ref[...] = jnp.zeros_like(sq_ref)

    sum_ref[...] += jnp.sum(y, axis=0).reshape(sum_ref.shape)
    sq_ref[...] += jnp.sum(y * y, axis=0).reshape(sq_ref.shape)


# ----------------------------------------------------------------------------
# Kernel 2: recompute the 1x1 matmul and apply folded BN affine + ReLU.
#   o = max((X @ W^T) * scale + shift, 0)
# with scale = gamma * inv_std, shift = (bias - mean) * scale + beta.
# ----------------------------------------------------------------------------
def _conv_bn_relu_kernel(x_ref, wt_ref, scale_ref, shift_ref, o_ref):
    y = jnp.dot(x_ref[...], wt_ref[...], preferred_element_type=jnp.float32)
    o_ref[...] = jnp.maximum(y * scale_ref[...] + shift_ref[...], 0.0)


def _vmem_estimate(tm, cin, cout, in_itemsize):
    """Rough per-step VMEM footprint (double-buffered inputs/outputs)."""
    x_buf = 2 * tm * cin * in_itemsize          # X tile, double-buffered
    w_buf = 2 * cin * cout * in_itemsize        # resident W (still 2 buffers)
    y_out = 2 * tm * cout * 4                   # kernel-2 f32 output tile
    y_tmp = tm * cout * 4                       # in-kernel f32 matmul result
    vecs = 16 * cout * 4                        # bias / scale / shift / stats
    return x_buf + w_buf + y_out + y_tmp + vecs


def _pick_tm(m, cin, cout, in_itemsize, vmem_budget=48 * 1024 * 1024):
    """Largest tile from {1024,512,256,128} that fits a v7x-safe VMEM budget."""
    for tm in (1024, 512, 256, 128):
        if tm > m:
            continue
        if _vmem_estimate(tm, cin, cout, in_itemsize) <= vmem_budget:
            return tm
    # Tiny M (or nothing fits): one small tile, rounded up to a sublane multiple.
    return max(8, ((min(m, 128) + 7) // 8) * 8)


def conv1x1_bn_relu(x_nchw, weight, bias, gamma, beta, *, eps=1e-5, tm=None,
                    compute_dtype=jnp.bfloat16):
    """Forward pass of Conv1x1 (Conv2d 1x1 -> BatchNorm2d(train) -> ReLU).

    x_nchw : (N, Cin, H, W) float32
    weight : (Cout, Cin, 1, 1) float32   (nn.Conv2d weight)
    bias   : (Cout,) float32
    gamma, beta : (Cout,) float32        (BatchNorm affine params)
    compute_dtype : dtype of MXU operands (bf16 recommended; accumulation f32)
    returns: (N, Cout, H, W) float32
    """
    N, Cin, H, W = x_nchw.shape
    Cout = weight.shape[0]
    M = N * H * W

    in_itemsize = jnp.dtype(compute_dtype).itemsize
    if tm is None:
        tm = _pick_tm(M, Cin, Cout, in_itemsize)

    # Grid shape: (num_cores, row_tiles_per_core); pad M up to a tile multiple.
    n_row_tiles = pl.cdiv(M, tm)
    nc = 2 if n_row_tiles >= 2 else 1
    tiles_per_core = pl.cdiv(n_row_tiles, nc)
    n_tiles = nc * tiles_per_core
    M_pad = n_tiles * tm
    pad_rows = M_pad - M

    # Glue: NCHW -> (M_pad, Cin) channels-last flattened view, cast for the MXU.
    x2d = jnp.transpose(x_nchw, (0, 2, 3, 1)).reshape(M, Cin).astype(jnp.float32)
    if pad_rows:
        x2d = jnp.pad(x2d, ((0, pad_rows), (0, 0)))
    x2d = x2d.astype(compute_dtype)
    wt = weight.reshape(Cout, Cin).T.astype(compute_dtype)          # (Cin, Cout)
    b2d = bias.reshape(1, Cout).astype(jnp.float32)

    vmem_limit = int(min(max(_vmem_estimate(tm, Cin, Cout, in_itemsize)
                             + (8 << 20), 32 << 20), 56 << 20))

    # ---------------- Pass 1: per-channel sum / sum-of-squares ----------------
    part_sum, part_sq = pl.pallas_call(
        _conv_stats_kernel,
        out_shape=(
            jax.ShapeDtypeStruct((nc, 1, Cout), jnp.float32),
            jax.ShapeDtypeStruct((nc, 1, Cout), jnp.float32),
        ),
        grid_spec=pltpu.PrefetchScalarGridSpec(
            num_scalar_prefetch=0,
            grid=(nc, tiles_per_core),
            in_specs=[
                pl.BlockSpec((tm, Cin),
                             lambda c, i, tpc=tiles_per_core: (c * tpc + i, 0)),
                pl.BlockSpec((Cin, Cout), lambda c, i: (0, 0)),
                pl.BlockSpec((1, Cout), lambda c, i: (0, 0)),
            ],
            out_specs=[
                pl.BlockSpec((1, 1, Cout), lambda c, i: (c, 0, 0)),
                pl.BlockSpec((1, 1, Cout), lambda c, i: (c, 0, 0)),
            ],
        ),
        compiler_params=pltpu.CompilerParams(
            dimension_semantics=("parallel", "arbitrary"),
            vmem_limit_bytes=vmem_limit),
    )(x2d, wt, b2d)

    # Glue: reduce per-core partials, remove the (exact) padded-row contribution
    # (each padded row produced y == bias), finalize BN stats and fold affine.
    ch_sum = jnp.sum(part_sum.reshape(nc, Cout), axis=0, keepdims=True)
    ch_sq = jnp.sum(part_sq.reshape(nc, Cout), axis=0, keepdims=True)
    if pad_rows:
        ch_sum = ch_sum - pad_rows * b2d
        ch_sq = ch_sq - pad_rows * (b2d * b2d)

    mean = ch_sum / M                                        # (1, Cout)
    var = jnp.maximum(ch_sq / M - mean * mean, 0.0)          # biased, clamped
    inv_std = 1.0 / jnp.sqrt(var + eps)
    scale = gamma.reshape(1, Cout).astype(jnp.float32) * inv_std
    shift = (b2d - mean) * scale + beta.reshape(1, Cout).astype(jnp.float32)

    # ---------------- Pass 2: matmul + folded BN affine + ReLU ----------------
    out2d = pl.pallas_call(
        _conv_bn_relu_kernel,
        out_shape=jax.ShapeDtypeStruct((M_pad, Cout), jnp.float32),
        grid_spec=pltpu.PrefetchScalarGridSpec(
            num_scalar_prefetch=0,
            grid=(n_tiles,),
            in_specs=[
                pl.BlockSpec((tm, Cin), lambda i: (i, 0)),
                pl.BlockSpec((Cin, Cout), lambda i: (0, 0)),
                pl.BlockSpec((1, Cout), lambda i: (0, 0)),
                pl.BlockSpec((1, Cout), lambda i: (0, 0)),
            ],
            out_specs=pl.BlockSpec((tm, Cout), lambda i: (i, 0)),
        ),
        compiler_params=pltpu.CompilerParams(
            dimension_semantics=("parallel",),
            vmem_limit_bytes=vmem_limit),
    )(x2d, wt, scale, shift)

    # Glue: drop padded rows, (M, Cout) -> NCHW.
    out2d = out2d[:M]
    return jnp.transpose(out2d.reshape(N, H, W, Cout), (0, 3, 1, 2))


def _reference(x_nchw, weight, bias, gamma, beta, eps=1e-5):
    """Pure-JAX reference of Conv2d(1x1) + BatchNorm2d(train) + ReLU."""
    w = weight.reshape(weight.shape[0], weight.shape[1])     # (Cout, Cin)
    y = jnp.einsum("nchw,oc->nohw", x_nchw, w) + bias[None, :, None, None]
    mean = jnp.mean(y, axis=(0, 2, 3), keepdims=True)
    var = jnp.mean((y - mean) ** 2, axis=(0, 2, 3), keepdims=True)
    yhat = (y - mean) / jnp.sqrt(var + eps)
    out = yhat * gamma[None, :, None, None] + beta[None, :, None, None]
    return jnp.maximum(out, 0.0)


if __name__ == "__main__":
    key = jax.random.PRNGKey(0)
    k_x, k_w, k_b = jax.random.split(key, 3)

    N, Cin, H, W = 2, 4, 16, 16
    Cout = 8

    x = jax.random.normal(k_x, (N, Cin, H, W), dtype=jnp.float32)

    # Deterministic, in-script parameter init (shapes match nn.Conv2d(inplanes,
    # planes, 1) and nn.BatchNorm2d(planes) defaults: gamma=1, beta=0).
    bound = 1.0 / (Cin ** 0.5)
    weight = jax.random.uniform(k_w, (Cout, Cin, 1, 1), jnp.float32, -bound, bound)
    bias = jax.random.uniform(k_b, (Cout,), jnp.float32, -bound, bound)
    gamma = jnp.ones((Cout,), jnp.float32)
    beta = jnp.zeros((Cout,), jnp.float32)

    # Full-precision path: tight check against the pure-JAX reference.
    out_f32 = conv1x1_bn_relu(x, weight, bias, gamma, beta,
                              compute_dtype=jnp.float32)
    out_f32 = jax.block_until_ready(out_f32)
    ref = _reference(x, weight, bias, gamma, beta)
    assert out_f32.shape == (N, Cout, H, W)
    assert jnp.allclose(out_f32, ref, atol=1e-4, rtol=1e-4), "f32 mismatch"

    # Default mixed-precision path (bf16 MXU operands, f32 accumulation):
    # compare against the reference evaluated on bf16-rounded inputs.
    out_bf = conv1x1_bn_relu(x, weight, bias, gamma, beta)
    out_bf = jax.block_until_ready(out_bf)
    x_r = x.astype(jnp.bfloat16).astype(jnp.float32)
    w_r = weight.astype(jnp.bfloat16).astype(jnp.float32)
    ref_bf = _reference(x_r, w_r, bias, gamma, beta)
    assert out_bf.shape == (N, Cout, H, W)
    assert jnp.allclose(out_bf, ref_bf, atol=2e-3, rtol=2e-3), "bf16 mismatch"

    print("KERNEL_OK")
</pallas_src>

<mosaic_0001>
module attributes {stable_mosaic.version = 11 : i64} {
  func.func @_conv_stats_kernel(%arg0: i32, %arg1: i32, %arg2: memref<512x4xf32, #tpu.memory_space<vmem>>, %arg3: memref<4x8xf32, #tpu.memory_space<vmem>>, %arg4: memref<1x8xf32, #tpu.memory_space<vmem>>, %arg5: memref<1x1x8xf32, #tpu.memory_space<vmem>>, %arg6: memref<1x1x8xf32, #tpu.memory_space<vmem>>) attributes {dimension_semantics = [#tpu.dimension_semantics<parallel>, #tpu.dimension_semantics<arbitrary>], iteration_bounds = array<i64: 1, 1>, scalar_prefetch = 0 : i64, scratch_operands = 0 : i64, tpu.core_type = #tpu.core_type<tc>, window_params = [{transform_indices = @transform_0, window_bounds = array<i64: 512, 4>}, {pipeline_mode = #tpu.pipeline_mode<synchronous>, transform_indices = @transform_1, window_bounds = array<i64: 4, 8>}, {pipeline_mode = #tpu.pipeline_mode<synchronous>, transform_indices = @transform_2, window_bounds = array<i64: 1, 8>}, {transform_indices = @transform_3, window_bounds = array<i64: 1, 1, 8>}, {transform_indices = @transform_4, window_bounds = array<i64: 1, 1, 8>}]} {
    %c0 = arith.constant 0 : index
    %c0_0 = arith.constant 0 : index
    %0 = vector.load %arg2[%c0, %c0_0] : memref<512x4xf32, #tpu.memory_space<vmem>>, vector<512x4xf32>
    %c0_1 = arith.constant 0 : index
    %c0_2 = arith.constant 0 : index
    %1 = vector.load %arg3[%c0_1, %c0_2] : memref<4x8xf32, #tpu.memory_space<vmem>>, vector<4x8xf32>
    %cst = arith.constant dense<0.000000e+00> : vector<512x8xf32>
    %2 = tpu.matmul %0, %1, %cst {dimension_numbers = #tpu.dot_dimension_numbers<[1], [0], [0], [1], [0, 0, 1, 1], [], []>} : vector<512x4xf32>, vector<4x8xf32>, vector<512x8xf32> -> vector<512x8xf32>
    %c0_3 = arith.constant 0 : index
    %c0_4 = arith.constant 0 : index
    %3 = vector.load %arg4[%c0_3, %c0_4] : memref<1x8xf32, #tpu.memory_space<vmem>>, vector<1x8xf32>
    %4 = vector.broadcast %3 : vector<1x8xf32> to vector<512x8xf32>
    %5 = arith.addf %2, %4 : vector<512x8xf32>
    %c0_i32 = arith.constant 0 : i32
    %6 = arith.cmpi eq, %arg1, %c0_i32 : i32
    %7 = arith.extui %6 : i1 to i32
    %c0_i32_5 = arith.constant 0 : i32
    %8 = arith.cmpi ne, %7, %c0_i32_5 : i32
    scf.if %8 {
      %cst_20 = arith.constant 0.000000e+00 : f32
      %20 = vector.broadcast %cst_20 : f32 to vector<1x1x8xf32>
      %c0_21 = arith.constant 0 : index
      %c0_22 = arith.constant 0 : index
      %c0_23 = arith.constant 0 : index
      %21 = vector.load %arg5[%c0_21, %c0_22, %c0_23] : memref<1x1x8xf32, #tpu.memory_space<vmem>>, vector<1x1x8xf32>
      tpu.vector_store %arg5[%c0_21, %c0_22, %c0_23], %20 {strides = array<i32>} : memref<1x1x8xf32, #tpu.memory_space<vmem>>, vector<1x1x8xf32>,
      %cst_24 = arith.constant 0.000000e+00 : f32
      %22 = vector.broadcast %cst_24 : f32 to vector<1x1x8xf32>
      %c0_25 = arith.constant 0 : index
      %c0_26 = arith.constant 0 : index
      %c0_27 = arith.constant 0 : index
      %23 = vector.load %arg6[%c0_25, %c0_26, %c0_27] : memref<1x1x8xf32, #tpu.memory_space<vmem>>, vector<1x1x8xf32>
      tpu.vector_store %arg6[%c0_25, %c0_26, %c0_27], %22 {strides = array<i32>} : memref<1x1x8xf32, #tpu.memory_space<vmem>>, vector<1x1x8xf32>,
    } else {
    }
    %c0_6 = arith.constant 0 : index
    %c0_7 = arith.constant 0 : index
    %c0_8 = arith.constant 0 : index
    %9 = vector.load %arg5[%c0_6, %c0_7, %c0_8] : memref<1x1x8xf32, #tpu.memory_space<vmem>>, vector<1x1x8xf32>
    %cst_9 = arith.constant dense<0.000000e+00> : vector<8xf32>
    %10 = vector.multi_reduction <add>, %5, %cst_9 [0] : vector<512x8xf32> to vector<8xf32>
    %11 = vector.shape_cast %10 : vector<8xf32> to vector<1x1x8xf32>
    %12 = arith.addf %9, %11 : vector<1x1x8xf32>
    %c0_10 = arith.constant 0 : index
    %c0_11 = arith.constant 0 : index
    %c0_12 = arith.constant 0 : index
    %13 = vector.load %arg5[%c0_10, %c0_11, %c0_12] : memref<1x1x8xf32, #tpu.memory_space<vmem>>, vector<1x1x8xf32>
    tpu.vector_store %arg5[%c0_10, %c0_11, %c0_12], %12 {strides = array<i32>} : memref<1x1x8xf32, #tpu.memory_space<vmem>>, vector<1x1x8xf32>,
    %c0_13 = arith.constant 0 : index
    %c0_14 = arith.constant 0 : index
    %c0_15 = arith.constant 0 : index
    %14 = vector.load %arg6[%c0_13, %c0_14, %c0_15] : memref<1x1x8xf32, #tpu.memory_space<vmem>>, vector<1x1x8xf32>
    %15 = arith.mulf %5, %5 : vector<512x8xf32>
    %cst_16 = arith.constant dense<0.000000e+00> : vector<8xf32>
    %16 = vector.multi_reduction <add>, %15, %cst_16 [0] : vector<512x8xf32> to vector<8xf32>
    %17 = vector.shape_cast %16 : vector<8xf32> to vector<1x1x8xf32>
    %18 = arith.addf %14, %17 : vector<1x1x8xf32>
    %c0_17 = arith.constant 0 : index
    %c0_18 = arith.constant 0 : index
    %c0_19 = arith.constant 0 : index
    %19 = vector.load %arg6[%c0_17, %c0_18, %c0_19] : memref<1x1x8xf32, #tpu.memory_space<vmem>>, vector<1x1x8xf32>
    tpu.vector_store %arg6[%c0_17, %c0_18, %c0_19], %18 {strides = array<i32>} : memref<1x1x8xf32, #tpu.memory_space<vmem>>, vector<1x1x8xf32>,
    return
  }
  func.func @transform_0(%arg0: i32, %arg1: i32) -> (i32, i32) {
    %c1_i32 = arith.constant 1 : i32
    %0 = arith.muli %arg0, %c1_i32 : i32
    %1 = arith.addi %0, %arg1 : i32
    %c0_i32 = arith.constant 0 : i32
    %c0_i32_0 = arith.constant 0 : i32
    return %1, %c0_i32 : i32, i32
  }
  func.func @transform_1(%arg0: i32, %arg1: i32) -> (i32, i32) {
    %c0_i32 = arith.constant 0 : i32
    %c0_i32_0 = arith.constant 0 : i32
    %c0_i32_1 = arith.constant 0 : i32
    return %c0_i32, %c0_i32_0 : i32, i32
  }
  func.func @transform_2(%arg0: i32, %arg1: i32) -> (i32, i32) {
    %c0_i32 = arith.constant 0 : i32
    %c0_i32_0 = arith.constant 0 : i32
    %c0_i32_1 = arith.constant 0 : i32
    return %c0_i32, %c0_i32_0 : i32, i32
  }
  func.func @transform_3(%arg0: i32, %arg1: i32) -> (i32, i32, i32) {
    %c0_i32 = arith.constant 0 : i32
    %c0_i32_0 = arith.constant 0 : i32
    %c0_i32_1 = arith.constant 0 : i32
    return %arg0, %c0_i32, %c0_i32_0 : i32, i32, i32
  }
  func.func @transform_4(%arg0: i32, %arg1: i32) -> (i32, i32, i32) {
    %c0_i32 = arith.constant 0 : i32
    %c0_i32_0 = arith.constant 0 : i32
    %c0_i32_1 = arith.constant 0 : i32
    return %arg0, %c0_i32, %c0_i32_0 : i32, i32, i32
  }
}

</mosaic_0001>

<llo_original>
// kernel: tpu_custom_call.1
$region0: #{tpu_custom_call.1}
  #allocation0 [shape = 'u32[]', space=smem, size = 0x4, offset = 0x4, fixed_abs, tag = 'smem constant byte address 0x4 - core index']
  #allocation1 [shape = 'u32[144,128]{1,0:T(1,128)}', space=vmem, size = 0x12000, scoped, tag = 'internal scratch']
  %s0 = inlined_call_operand.vmem [shape: f32[512,4], index: 0, kind: input, shape index: {}]
  %s1 = inlined_call_operand.vmem [shape: f32[4,8], index: 1, kind: input, shape index: {}]
  %s2 = inlined_call_operand.vmem [shape: f32[1,8], index: 2, kind: input, shape index: {}]
  %s3 = inlined_call_operand.hbm [shape: f32[1,1,8], index: 3, kind: output, shape index: {0}]
  %s4 = inlined_call_operand.hbm [shape: f32[1,1,8], index: 4, kind: output, shape index: {1}]
  %5 = xla_tuple %s3, %s4
  %s6 = sld [smem:[#allocation0]]
  $region34: #{tpu_custom_call.1} parent=0
    _
  %s8 = ssub.s32 1, %s6
  %s9 = scalar_select 0, %s8, %s6
  $region1: #{tpu_custom_call.1} parent=0
    #allocation2 [shape = 'u8[512]{0}', space=vmem, size = 0x400, scoped, tag = 'output window, operand 0, single buffered']
    #allocation3 [shape = 's32[1]{0}', space=sflag, size = 0x4, scoped, tag = 'scoped memory for tpu_custom_call.1']
    #allocation4 [shape = 'u8[512]{0}', space=vmem, size = 0x400, scoped, tag = 'output window, operand 1, single buffered']
    #allocation5 [shape = 's32[1]{0}', space=sflag, size = 0x4, scoped, tag = 'scoped memory for tpu_custom_call.1']
    %10 = vsyncpa [#allocation3], 0
    %11 = vsyncpa [#allocation5], 0
    // Predicated region
    $region2: #{tpu_custom_call.1} parent=1 // pred_check
      _
    $region3: #{tpu_custom_call.1} parent=1 // pred_check_branch
      %13 = sbr.rel (0) target = $region5
    $region4: #{tpu_custom_call.1} parent=1 // pred_region
      %s14 = sadd.s32 0, 0
      %s15 = smul.u32 64, %s14
      %p16 = scmp.lt.s32.totalorder %s15, 63
      %s17 = scalar_select %p16, %s15, 63
      %s18 = smul.addr %s17, 8
      %s19 = scalar_lea.vmem %s0, %s18
      %s20 = sadd.s32 0, 0
      %s21 = smul.u32 64, %s20
    $region5: #{tpu_custom_call.1} parent=1 // pred_fallthru
      _
    // Predicated region
    $region6: #{tpu_custom_call.1} parent=1 // pred_check
      _
    $region7: #{tpu_custom_call.1} parent=1 // pred_check_branch
      %23 = sbr.rel (0) target = $region9
    $region8: #{tpu_custom_call.1} parent=1 // pred_region
      _
    $region9: #{tpu_custom_call.1} parent=1 // pred_fallthru
      _
    // Predicated region
    $region10: #{tpu_custom_call.1} parent=1 // pred_check
      _
    $region11: #{tpu_custom_call.1} parent=1 // pred_check_branch
      %25 = sbr.rel (0) target = $region13
    $region12: #{tpu_custom_call.1} parent=1 // pred_region
      _
    $region13: #{tpu_custom_call.1} parent=1 // pred_fallthru
      _
    %s26 = sadd.s32 0, 0
    %s27 = smul.u32 64, %s26
    %p28 = scmp.lt.s32.totalorder %s27, 63
    %s29 = scalar_select %p28, %s27, 63
    %s30 = smul.addr %s29, 8
    %s31 = scalar_lea.vmem %s0, %s30
    %s32 = sadd.s32 0, 0
    %s33 = smul.u32 64, %s32
    %p34 = scmp.lt.s32.totalorder %s33, 63
    %s35 = scalar_select %p34, %s33, 63
    %s36 = smul.addr %s35, 8
    %s37 = scalar_lea.vmem %s0, %s36
    %s38 = sadd.s32 0, 0
    %s39 = smul.u32 64, %s38
    %v40 = vld [vmem:[%s37] sm:$0xff]
    %v41 = vld [vmem:[%s37 + $0x8] sm:$0xff]
    %v42 = vld [vmem:[%s37 + $0x10] sm:$0xff]
    %v43 = vld [vmem:[%s37 + $0x18] sm:$0xff]
    %v44 = vld [vmem:[%s37 + $0x20] sm:$0xff]
    %v45 = vld [vmem:[%s37 + $0x28] sm:$0xff]
    %v46 = vld [vmem:[%s37 + $0x30] sm:$0xff]
    %v47 = vld [vmem:[%s37 + $0x38] sm:$0xff]
    %v48 = vld [vmem:[%s37 + $0x40] sm:$0xff]
    %v49 = vld [vmem:[%s37 + $0x48] sm:$0xff]
    %v50 = vld [vmem:[%s37 + $0x50] sm:$0xff]
    %v51 = vld [vmem:[%s37 + $0x58] sm:$0xff]
    %v52 = vld [vmem:[%s37 + $0x60] sm:$0xff]
    %v53 = vld [vmem:[%s37 + $0x68] sm:$0xff]
    %v54 = vld [vmem:[%s37 + $0x70] sm:$0xff]
    %v55 = vld [vmem:[%s37 + $0x78] sm:$0xff]
    %v56 = vld [vmem:[%s37 + $0x80] sm:$0xff]
    %v57 = vld [vmem:[%s37 + $0x88] sm:$0xff]
    %v58 = vld [vmem:[%s37 + $0x90] sm:$0xff]
    %v59 = vld [vmem:[%s37 + $0x98] sm:$0xff]
    %v60 = vld [vmem:[%s37 + $0xa0] sm:$0xff]
    %v61 = vld [vmem:[%s37 + $0xa8] sm:$0xff]
    %v62 = vld [vmem:[%s37 + $0xb0] sm:$0xff]
    %v63 = vld [vmem:[%s37 + $0xb8] sm:$0xff]
    %v64 = vld [vmem:[%s37 + $0xc0] sm:$0xff]
    %v65 = vld [vmem:[%s37 + $0xc8] sm:$0xff]
    %v66 = vld [vmem:[%s37 + $0xd0] sm:$0xff]
    %v67 = vld [vmem:[%s37 + $0xd8] sm:$0xff]
    %v68 = vld [vmem:[%s37 + $0xe0] sm:$0xff]
    %v69 = vld [vmem:[%s37 + $0xe8] sm:$0xff]
    %v70 = vld [vmem:[%s37 + $0xf0] sm:$0xff]
    %v71 = vld [vmem:[%s37 + $0xf8] sm:$0xff]
    %v72 = vld [vmem:[%s37 + $0x100] sm:$0xff]
    %v73 = vld [vmem:[%s37 + $0x108] sm:$0xff]
    %v74 = vld [vmem:[%s37 + $0x110] sm:$0xff]
    %v75 = vld [vmem:[%s37 + $0x118] sm:$0xff]
    %v76 = vld [vmem:[%s37 + $0x120] sm:$0xff]
    %v77 = vld [vmem:[%s37 + $0x128] sm:$0xff]
    %v78 = vld [vmem:[%s37 + $0x130] sm:$0xff]
    %v79 = vld [vmem:[%s37 + $0x138] sm:$0xff]
    %v80 = vld [vmem:[%s37 + $0x140] sm:$0xff]
    %v81 = vld [vmem:[%s37 + $0x148] sm:$0xff]
    %v82 = vld [vmem:[%s37 + $0x150] sm:$0xff]
    %v83 = vld [vmem:[%s37 + $0x158] sm:$0xff]
    %v84 = vld [vmem:[%s37 + $0x160] sm:$0xff]
    %v85 = vld [vmem:[%s37 + $0x168] sm:$0xff]
    %v86 = vld [vmem:[%s37 + $0x170] sm:$0xff]
    %v87 = vld [vmem:[%s37 + $0x178] sm:$0xff]
    %v88 = vld [vmem:[%s37 + $0x180] sm:$0xff]
    %v89 = vld [vmem:[%s37 + $0x188] sm:$0xff]
    %v90 = vld [vmem:[%s37 + $0x190] sm:$0xff]
    %v91 = vld [vmem:[%s37 + $0x198] sm:$0xff]
    %v92 = vld [vmem:[%s37 + $0x1a0] sm:$0xff]
    %v93 = vld [vmem:[%s37 + $0x1a8] sm:$0xff]
    %v94 = vld [vmem:[%s37 + $0x1b0] sm:$0xff]
    %v95 = vld [vmem:[%s37 + $0x1b8] sm:$0xff]
    %v96 = vld [vmem:[%s37 + $0x1c0] sm:$0xff]
    %v97 = vld [vmem:[%s37 + $0x1c8] sm:$0xff]
    %v98 = vld [vmem:[%s37 + $0x1d0] sm:$0xff]
    %v99 = vld [vmem:[%s37 + $0x1d8] sm:$0xff]
    %v100 = vld [vmem:[%s37 + $0x1e0] sm:$0xff]
    %v101 = vld [vmem:[%s37 + $0x1e8] sm:$0xff]
    %v102 = vld [vmem:[%s37 + $0x1f0] sm:$0xff]
    %v103 = vld [vmem:[%s37 + $0x1f8] sm:$0xff]
    %v104 = vld [vmem:[%s1] sm:$0xf]
    %v105 = vld [vmem:[%s2] sm:$0x1]
    %v107 = vlaneseq
    %v108 = vshrl.u32 %v107, 7
    %v109 = vsub.s32 0, %v108
    %v110 = vrot.slane %v105, %v109
    %vm112 = vcmask 31744
    %v114 = vsel %vm112, %v40, 0
    %v117 = vsel %vm112, %v41, 0
    %v120 = vsel %vm112, %v42, 0
    %v123 = vsel %vm112, %v43, 0
    %v126 = vsel %vm112, %v44, 0
    %v129 = vsel %vm112, %v45, 0
    %v132 = vsel %vm112, %v46, 0
    %v135 = vsel %vm112, %v47, 0
    %v138 = vsel %vm112, %v48, 0
    %v141 = vsel %vm112, %v49, 0
    %v144 = vsel %vm112, %v50, 0
    %v147 = vsel %vm112, %v51, 0
    %v150 = vsel %vm112, %v52, 0
    %v153 = vsel %vm112, %v53, 0
    %v156 = vsel %vm112, %v54, 0
    %v159 = vsel %vm112, %v55, 0
    %v162 = vsel %vm112, %v56, 0
    %v165 = vsel %vm112, %v57, 0
    %v168 = vsel %vm112, %v58, 0
    %v171 = vsel %vm112, %v59, 0
    %v174 = vsel %vm112, %v60, 0
    %v177 = vsel %vm112, %v61, 0
    %v180 = vsel %vm112, %v62, 0
    %v183 = vsel %vm112, %v63, 0
    %v186 = vsel %vm112, %v64, 0
    %v189 = vsel %vm112, %v65, 0
    %v192 = vsel %vm112, %v66, 0
    %v195 = vsel %vm112, %v67, 0
    %v198 = vsel %vm112, %v68, 0
    %v201 = vsel %vm112, %v69, 0
    %v204 = vsel %vm112, %v70, 0
    %v207 = vsel %vm112, %v71, 0
    %v210 = vsel %vm112, %v72, 0
    %v213 = vsel %vm112, %v73, 0
    %v216 = vsel %vm112, %v74, 0
    %v219 = vsel %vm112, %v75, 0
    %v222 = vsel %vm112, %v76, 0
    %v225 = vsel %vm112, %v77, 0
    %v228 = vsel %vm112, %v78, 0
    %v231 = vsel %vm112, %v79, 0
    %v234 = vsel %vm112, %v80, 0
    %v237 = vsel %vm112, %v81, 0
    %v240 = vsel %vm112, %v82, 0
    %v243 = vsel %vm112, %v83, 0
    %v246 = vsel %vm112, %v84, 0
    %v249 = vsel %vm112, %v85, 0
    %v252 = vsel %vm112, %v86, 0
    %v255 = vsel %vm112, %v87, 0
    %v258 = vsel %vm112, %v88, 0
    %v261 = vsel %vm112, %v89, 0
    %v264 = vsel %vm112, %v90, 0
    %v267 = vsel %vm112, %v91, 0
    %v270 = vsel %vm112, %v92, 0
    %v273 = vsel %vm112, %v93, 0
    %v276 = vsel %vm112, %v94, 0
    %v279 = vsel %vm112, %v95, 0
    %v282 = vsel %vm112, %v96, 0
    %v285 = vsel %vm112, %v97, 0
    %v288 = vsel %vm112, %v98, 0
    %v291 = vsel %vm112, %v99, 0
    %v294 = vsel %vm112, %v100, 0
    %v297 = vsel %vm112, %v101, 0
    %v300 = vsel %vm112, %v102, 0
    %v303 = vsel %vm112, %v103, 0
    %vm305 = vcmask 1043456
    %v307 = vsel %vm305, %v104, 0
    %309 = vmatprep.subr.mxu0 0.0
    %310 = vmatpush1.msra.mxu0 0.0
    %311 = vmatprep.subr.mxu0 0.0
    %312 = vmatpush1.msra.mxu0 0.0
    %313 = vmatprep.subr.mxu0 0.0
    %314 = vmatpush1.msra.mxu0 0.0
    %315 = vmatprep.subr.mxu0 0.0
    %316 = vmatpush1.msra.mxu0 0.0
    %317 = vmatprep.subr.mxu0 0.0
    %318 = vmatpush1.msra.mxu0 0.0
    %319 = vmatprep.subr.mxu0 0.0
    %320 = vmatpush1.msra.mxu0 0.0
    %321 = vmatprep.subr.mxu0 0.0
    %322 = vmatpush1.msra.mxu0 0.0
    %323 = vmatprep.subr.mxu0 0.0
    %324 = vmatpush1.msra.mxu0 0.0
    %325 = vmatprep.subr.mxu0 0.0
    %326 = vmatpush1.msra.mxu0 0.0
    %327 = vmatprep.subr.mxu0 0.0
    %328 = vmatpush1.msra.mxu0 0.0
    %329 = vmatprep.subr.mxu0 0.0
    %330 = vmatpush1.msra.mxu0 0.0
    %331 = vmatprep.subr.mxu0 0.0
    %332 = vmatpush1.msra.mxu0 0.0
    %333 = vmatprep.subr.mxu0 0.0
    %334 = vmatpush1.msra.mxu0 0.0
    %335 = vmatprep.subr.mxu0 0.0
    %336 = vmatpush1.msra.mxu0 0.0
    %337 = vmatprep.subr.mxu0 0.0
    %338 = vmatpush1.msra.mxu0 0.0
    %339 = vmatprep.subr.mxu0 0.0
    %340 = vmatpush1.msra.mxu0 %v307
    %341 = vmatprep.subr.mxu0 0.0
    %342 = vmatpush2.msra.mxu0 0.0
    %343 = vmatprep.subr.mxu0 0.0
    %344 = vmatpush2.msra.mxu0 0.0
    %345 = vmatprep.subr.mxu0 0.0
    %346 = vmatpush2.msra.mxu0 0.0
    %347 = vmatprep.subr.mxu0 0.0
    %348 = vmatpush2.msra.mxu0 0.0
    %349 = vmatprep.subr.mxu0 0.0
    %350 = vmatpush2.msra.mxu0 0.0
    %351 = vmatprep.subr.mxu0 0.0
    %352 = vmatpush2.msra.mxu0 0.0
    %353 = vmatprep.subr.mxu0 0.0
    %354 = vmatpush2.msra.mxu0 0.0
    %355 = vmatprep.subr.mxu0 0.0
    %356 = vmatpush2.msra.mxu0 0.0
    %357 = vmatprep.subr.mxu0 0.0
    %358 = vmatpush2.msra.mxu0 0.0
    %359 = vmatprep.subr.mxu0 0.0
    %360 = vmatpush2.msra.mxu0 0.0
    %361 = vmatprep.subr.mxu0 0.0
    %362 = vmatpush2.msra.mxu0 0.0
    %363 = vmatprep.subr.mxu0 0.0
    %364 = vmatpush2.msra.mxu0 0.0
    %365 = vmatprep.subr.mxu0 0.0
    %366 = vmatpush2.msra.mxu0 0.0
    %367 = vmatprep.subr.mxu0 0.0
    %368 = vmatpush2.msra.mxu0 0.0
    %369 = vmatprep.subr.mxu0 0.0
    %370 = vmatpush2.msra.mxu0 0.0
    %371 = vmatprep.subr.mxu0 0.0
    %372 = vmatpush2.msra.mxu0 0.0
    %373 = vmatprep.mubr.f32.mxu0 0.0
    %374 = vmatmul.mubr.f32.gmra.mxu0 %v114
    %v375 = vpop.f32.mrf.mxu0
    %v376 = vadd.f32 %v110, %v375
    %v377 = vpop.f32.mrf.mxu0
    %378 = vmatprep.mubr.f32.mxu0 0.0
    %379 = vmatmul.mubr.f32.gmra.mxu0 %v117
    %v380 = vpop.f32.mrf.mxu0
    %v381 = vadd.f32 %v110, %v380
    %v382 = vpop.f32.mrf.mxu0
    %383 = vmatprep.mubr.f32.mxu0 0.0
    %384 = vmatmul.mubr.f32.gmra.mxu0 %v120
    %v385 = vpop.f32.mrf.mxu0
    %v386 = vadd.f32 %v110, %v385
    %v387 = vpop.f32.mrf.mxu0
    %388 = vmatprep.mubr.f32.mxu0 0.0
    %389 = vmatmul.mubr.f32.gmra.mxu0 %v123
    %v390 = vpop.f32.mrf.mxu0
    %v391 = vadd.f32 %v110, %v390
    %v392 = vpop.f32.mrf.mxu0
    %393 = vmatprep.mubr.f32.mxu0 0.0
    %394 = vmatmul.mubr.f32.gmra.mxu0 %v126
    %v395 = vpop.f32.mrf.mxu0
    %v396 = vadd.f32 %v110, %v395
    %v397 = vpop.f32.mrf.mxu0
    %398 = vmatprep.mubr.f32.mxu0 0.0
    %399 = vmatmul.mubr.f32.gmra.mxu0 %v129
    %v400 = vpop.f32.mrf.mxu0
    %v401 = vadd.f32 %v110, %v400
    %v402 = vpop.f32.mrf.mxu0
    %403 = vmatprep.mubr.f32.mxu0 0.0
    %404 = vmatmul.mubr.f32.gmra.mxu0 %v132
    %v405 = vpop.f32.mrf.mxu0
    %v406 = vadd.f32 %v110, %v405
    %v407 = vpop.f32.mrf.mxu0
    %408 = vmatprep.mubr.f32.mxu0 0.0
    %409 = vmatmul.mubr.f32.gmra.mxu0 %v135
    %v410 = vpop.f32.mrf.mxu0
    %v411 = vadd.f32 %v110, %v410
    %v412 = vpop.f32.mrf.mxu0
    %413 = vmatprep.mubr.f32.mxu0 0.0
    %414 = vmatmul.mubr.f32.gmra.mxu0 %v138
    %v415 = vpop.f32.mrf.mxu0
    %v416 = vadd.f32 %v110, %v415
    %v417 = vpop.f32.mrf.mxu0
    %418 = vmatprep.mubr.f32.mxu0 0.0
    %419 = vmatmul.mubr.f32.gmra.mxu0 %v141
    %v420 = vpop.f32.mrf.mxu0
    %v421 = vadd.f32 %v110, %v420
    %v422 = vpop.f32.mrf.mxu0
    %423 = vmatprep.mubr.f32.mxu0 0.0
    %424 = vmatmul.mubr.f32.gmra.mxu0 %v144
    %v425 = vpop.f32.mrf.mxu0
    %v426 = vadd.f32 %v110, %v425
    %v427 = vpop.f32.mrf.mxu0
    %428 = vmatprep.mubr.f32.mxu0 0.0
    %429 = vmatmul.mubr.f32.gmra.mxu0 %v147
    %v430 = vpop.f32.mrf.mxu0
    %v431 = vadd.f32 %v110, %v430
    %v432 = vpop.f32.mrf.mxu0
    %433 = vmatprep.mubr.f32.mxu0 0.0
    %434 = vmatmul.mubr.f32.gmra.mxu0 %v150
    %v435 = vpop.f32.mrf.mxu0
    %v436 = vadd.f32 %v110, %v435
    %v437 = vpop.f32.mrf.mxu0
    %438 = vmatprep.mubr.f32.mxu0 0.0
    %439 = vmatmul.mubr.f32.gmra.mxu0 %v153
    %v440 = vpop.f32.mrf.mxu0
    %v441 = vadd.f32 %v110, %v440
    %v442 = vpop.f32.mrf.mxu0
    %443 = vmatprep.mubr.f32.mxu0 0.0
    %444 = vmatmul.mubr.f32.gmra.mxu0 %v156
    %v445 = vpop.f32.mrf.mxu0
    %v446 = vadd.f32 %v110, %v445
    %v447 = vpop.f32.mrf.mxu0
    %448 = vmatprep.mubr.f32.mxu0 0.0
    %449 = vmatmul.mubr.f32.gmra.mxu0 %v159
    %v450 = vpop.f32.mrf.mxu0
    %v451 = vadd.f32 %v110, %v450
    %v452 = vpop.f32.mrf.mxu0
    %453 = vmatprep.mubr.f32.mxu0 0.0
    %454 = vmatmul.mubr.f32.gmra.mxu0 %v162
    %v455 = vpop.f32.mrf.mxu0
    %v456 = vadd.f32 %v110, %v455
    %v457 = vpop.f32.mrf.mxu0
    %458 = vmatprep.mubr.f32.mxu0 0.0
    %459 = vmatmul.mubr.f32.gmra.mxu0 %v165
    %v460 = vpop.f32.mrf.mxu0
    %v461 = vadd.f32 %v110, %v460
    %v462 = vpop.f32.mrf.mxu0
    %463 = vmatprep.mubr.f32.mxu0 0.0
    %464 = vmatmul.mubr.f32.gmra.mxu0 %v168
    %v465 = vpop.f32.mrf.mxu0
    %v466 = vadd.f32 %v110, %v465
    %v467 = vpop.f32.mrf.mxu0
    %468 = vmatprep.mubr.f32.mxu0 0.0
    %469 = vmatmul.mubr.f32.gmra.mxu0 %v171
    %v470 = vpop.f32.mrf.mxu0
    %v471 = vadd.f32 %v110, %v470
    %v472 = vpop.f32.mrf.mxu0
    %473 = vmatprep.mubr.f32.mxu0 0.0
    %474 = vmatmul.mubr.f32.gmra.mxu0 %v174
    %v475 = vpop.f32.mrf.mxu0
    %v476 = vadd.f32 %v110, %v475
    %v477 = vpop.f32.mrf.mxu0
    %478 = vmatprep.mubr.f32.mxu0 0.0
    %479 = vmatmul.mubr.f32.gmra.mxu0 %v177
    %v480 = vpop.f32.mrf.mxu0
    %v481 = vadd.f32 %v110, %v480
    %v482 = vpop.f32.mrf.mxu0
    %483 = vmatprep.mubr.f32.mxu0 0.0
    %484 = vmatmul.mubr.f32.gmra.mxu0 %v180
    %v485 = vpop.f32.mrf.mxu0
    %v486 = vadd.f32 %v110, %v485
    %v487 = vpop.f32.mrf.mxu0
    %488 = vmatprep.mubr.f32.mxu0 0.0
    %489 = vmatmul.mubr.f32.gmra.mxu0 %v183
    %v490 = vpop.f32.mrf.mxu0
    %v491 = vadd.f32 %v110, %v490
    %v492 = vpop.f32.mrf.mxu0
    %493 = vmatprep.mubr.f32.mxu0 0.0
    %494 = vmatmul.mubr.f32.gmra.mxu0 %v186
    %v495 = vpop.f32.mrf.mxu0
    %v496 = vadd.f32 %v110, %v495
    %v497 = vpop.f32.mrf.mxu0
    %498 = vmatprep.mubr.f32.mxu0 0.0
    %499 = vmatmul.mubr.f32.gmra.mxu0 %v189
    %v500 = vpop.f32.mrf.mxu0
    %v501 = vadd.f32 %v110, %v500
    %v502 = vpop.f32.mrf.mxu0
    %503 = vmatprep.mubr.f32.mxu0 0.0
    %504 = vmatmul.mubr.f32.gmra.mxu0 %v192
    %v505 = vpop.f32.mrf.mxu0
    %v506 = vadd.f32 %v110, %v505
    %v507 = vpop.f32.mrf.mxu0
    %508 = vmatprep.mubr.f32.mxu0 0.0
    %509 = vmatmul.mubr.f32.gmra.mxu0 %v195
    %v510 = vpop.f32.mrf.mxu0
    %v511 = vadd.f32 %v110, %v510
    %v512 = vpop.f32.mrf.mxu0
    %513 = vmatprep.mubr.f32.mxu0 0.0
    %514 = vmatmul.mubr.f32.gmra.mxu0 %v198
    %v515 = vpop.f32.mrf.mxu0
    %v516 = vadd.f32 %v110, %v515
    %v517 = vpop.f32.mrf.mxu0
    %518 = vmatprep.mubr.f32.mxu0 0.0
    %519 = vmatmul.mubr.f32.gmra.mxu0 %v201
    %v520 = vpop.f32.mrf.mxu0
    %v521 = vadd.f32 %v110, %v520
    %v522 = vpop.f32.mrf.mxu0
    %523 = vmatprep.mubr.f32.mxu0 0.0
    %524 = vmatmul.mubr.f32.gmra.mxu0 %v204
    %v525 = vpop.f32.mrf.mxu0
    %v526 = vadd.f32 %v110, %v525
    %v527 = vpop.f32.mrf.mxu0
    %528 = vmatprep.mubr.f32.mxu0 0.0
    %529 = vmatmul.mubr.f32.gmra.mxu0 %v207
    %v530 = vpop.f32.mrf.mxu0
    %v531 = vadd.f32 %v110, %v530
    %v532 = vpop.f32.mrf.mxu0
    %533 = vmatprep.mubr.f32.mxu0 0.0
    %534 = vmatmul.mubr.f32.gmra.mxu0 %v210
    %v535 = vpop.f32.mrf.mxu0
    %v536 = vadd.f32 %v110, %v535
    %v537 = vpop.f32.mrf.mxu0
    %538 = vmatprep.mubr.f32.mxu0 0.0
    %539 = vmatmul.mubr.f32.gmra.mxu0 %v213
    %v540 = vpop.f32.mrf.mxu0
    %v541 = vadd.f32 %v110, %v540
    %v542 = vpop.f32.mrf.mxu0
    %543 = vmatprep.mubr.f32.mxu0 0.0
    %544 = vmatmul.mubr.f32.gmra.mxu0 %v216
    %v545 = vpop.f32.mrf.mxu0
    %v546 = vadd.f32 %v110, %v545
    %v547 = vpop.f32.mrf.mxu0
    %548 = vmatprep.mubr.f32.mxu0 0.0
    %549 = vmatmul.mubr.f32.gmra.mxu0 %v219
    %v550 = vpop.f32.mrf.mxu0
    %v551 = vadd.f32 %v110, %v550
    %v552 = vpop.f32.mrf.mxu0
    %553 = vmatprep.mubr.f32.mxu0 0.0
    %554 = vmatmul.mubr.f32.gmra.mxu0 %v222
    %v555 = vpop.f32.mrf.mxu0
    %v556 = vadd.f32 %v110, %v555
    %v557 = vpop.f32.mrf.mxu0
    %558 = vmatprep.mubr.f32.mxu0 0.0
    %559 = vmatmul.mubr.f32.gmra.mxu0 %v225
    %v560 = vpop.f32.mrf.mxu0
    %v561 = vadd.f32 %v110, %v560
    %v562 = vpop.f32.mrf.mxu0
    %563 = vmatprep.mubr.f32.mxu0 0.0
    %564 = vmatmul.mubr.f32.gmra.mxu0 %v228
    %v565 = vpop.f32.mrf.mxu0
    %v566 = vadd.f32 %v110, %v565
    %v567 = vpop.f32.mrf.mxu0
    %568 = vmatprep.mubr.f32.mxu0 0.0
    %569 = vmatmul.mubr.f32.gmra.mxu0 %v231
    %v570 = vpop.f32.mrf.mxu0
    %v571 = vadd.f32 %v110, %v570
    %v572 = vpop.f32.mrf.mxu0
    %573 = vmatprep.mubr.f32.mxu0 0.0
    %574 = vmatmul.mubr.f32.gmra.mxu0 %v234
    %v575 = vpop.f32.mrf.mxu0
    %v576 = vadd.f32 %v110, %v575
    %v577 = vpop.f32.mrf.mxu0
    %578 = vmatprep.mubr.f32.mxu0 0.0
    %579 = vmatmul.mubr.f32.gmra.mxu0 %v237
    %v580 = vpop.f32.mrf.mxu0
    %v581 = vadd.f32 %v110, %v580
    %v582 = vpop.f32.mrf.mxu0
    %583 = vmatprep.mubr.f32.mxu0 0.0
    %584 = vmatmul.mubr.f32.gmra.mxu0 %v240
    %v585 = vpop.f32.mrf.mxu0
    %v586 = vadd.f32 %v110, %v585
    %v587 = vpop.f32.mrf.mxu0
    %588 = vmatprep.mubr.f32.mxu0 0.0
    %589 = vmatmul.mubr.f32.gmra.mxu0 %v243
    %v590 = vpop.f32.mrf.mxu0
    %v591 = vadd.f32 %v110, %v590
    %v592 = vpop.f32.mrf.mxu0
    %593 = vmatprep.mubr.f32.mxu0 0.0
    %594 = vmatmul.mubr.f32.gmra.mxu0 %v246
    %v595 = vpop.f32.mrf.mxu0
    %v596 = vadd.f32 %v110, %v595
    %v597 = vpop.f32.mrf.mxu0
    %598 = vmatprep.mubr.f32.mxu0 0.0
    %599 = vmatmul.mubr.f32.gmra.mxu0 %v249
    %v600 = vpop.f32.mrf.mxu0
    %v601 = vadd.f32 %v110, %v600
    %v602 = vpop.f32.mrf.mxu0
    %603 = vmatprep.mubr.f32.mxu0 0.0
    %604 = vmatmul.mubr.f32.gmra.mxu0 %v252
    %v605 = vpop.f32.mrf.mxu0
    %v606 = vadd.f32 %v110, %v605
    %v607 = vpop.f32.mrf.mxu0
    %608 = vmatprep.mubr.f32.mxu0 0.0
    %609 = vmatmul.mubr.f32.gmra.mxu0 %v255
    %v610 = vpop.f32.mrf.mxu0
    %v611 = vadd.f32 %v110, %v610
    %v612 = vpop.f32.mrf.mxu0
    %613 = vmatprep.mubr.f32.mxu0 0.0
    %614 = vmatmul.mubr.f32.gmra.mxu0 %v258
    %v615 = vpop.f32.mrf.mxu0
    %v616 = vadd.f32 %v110, %v615
    %v617 = vpop.f32.mrf.mxu0
    %618 = vmatprep.mubr.f32.mxu0 0.0
    %619 = vmatmul.mubr.f32.gmra.mxu0 %v261
    %v620 = vpop.f32.mrf.mxu0
    %v621 = vadd.f32 %v110, %v620
    %v622 = vpop.f32.mrf.mxu0
    %623 = vmatprep.mubr.f32.mxu0 0.0
    %624 = vmatmul.mubr.f32.gmra.mxu0 %v264
    %v625 = vpop.f32.mrf.mxu0
    %v626 = vadd.f32 %v110, %v625
    %v627 = vpop.f32.mrf.mxu0
    %628 = vmatprep.mubr.f32.mxu0 0.0
    %629 = vmatmul.mubr.f32.gmra.mxu0 %v267
    %v630 = vpop.f32.mrf.mxu0
    %v631 = vadd.f32 %v110, %v630
    %v632 = vpop.f32.mrf.mxu0
    %633 = vmatprep.mubr.f32.mxu0 0.0
    %634 = vmatmul.mubr.f32.gmra.mxu0 %v270
    %v635 = vpop.f32.mrf.mxu0
    %v636 = vadd.f32 %v110, %v635
    %v637 = vpop.f32.mrf.mxu0
    %638 = vmatprep.mubr.f32.mxu0 0.0
    %639 = vmatmul.mubr.f32.gmra.mxu0 %v273
    %v640 = vpop.f32.mrf.mxu0
    %v641 = vadd.f32 %v110, %v640
    %v642 = vpop.f32.mrf.mxu0
    %643 = vmatprep.mubr.f32.mxu0 0.0
    %644 = vmatmul.mubr.f32.gmra.mxu0 %v276
    %v645 = vpop.f32.mrf.mxu0
    %v646 = vadd.f32 %v110, %v645
    %v647 = vpop.f32.mrf.mxu0
    %648 = vmatprep.mubr.f32.mxu0 0.0
    %649 = vmatmul.mubr.f32.gmra.mxu0 %v279
    %v650 = vpop.f32.mrf.mxu0
    %v651 = vadd.f32 %v110, %v650
    %v652 = vpop.f32.mrf.mxu0
    %653 = vmatprep.mubr.f32.mxu0 0.0
    %654 = vmatmul.mubr.f32.gmra.mxu0 %v282
    %v655 = vpop.f32.mrf.mxu0
    %v656 = vadd.f32 %v110, %v655
    %v657 = vpop.f32.mrf.mxu0
    %658 = vmatprep.mubr.f32.mxu0 0.0
    %659 = vmatmul.mubr.f32.gmra.mxu0 %v285
    %v660 = vpop.f32.mrf.mxu0
    %v661 = vadd.f32 %v110, %v660
    %v662 = vpop.f32.mrf.mxu0
    %663 = vmatprep.mubr.f32.mxu0 0.0
    %664 = vmatmul.mubr.f32.gmra.mxu0 %v288
    %v665 = vpop.f32.mrf.mxu0
    %v666 = vadd.f32 %v110, %v665
    %v667 = vpop.f32.mrf.mxu0
    %668 = vmatprep.mubr.f32.mxu0 0.0
    %669 = vmatmul.mubr.f32.gmra.mxu0 %v291
    %v670 = vpop.f32.mrf.mxu0
    %v671 = vadd.f32 %v110, %v670
    %v672 = vpop.f32.mrf.mxu0
    %673 = vmatprep.mubr.f32.mxu0 0.0
    %674 = vmatmul.mubr.f32.gmra.mxu0 %v294
    %v675 = vpop.f32.mrf.mxu0
    %v676 = vadd.f32 %v110, %v675
    %v677 = vpop.f32.mrf.mxu0
    %678 = vmatprep.mubr.f32.mxu0 0.0
    %679 = vmatmul.mubr.f32.gmra.mxu0 %v297
    %v680 = vpop.f32.mrf.mxu0
    %v681 = vadd.f32 %v110, %v680
    %v682 = vpop.f32.mrf.mxu0
    %683 = vmatprep.mubr.f32.mxu0 0.0
    %684 = vmatmul.mubr.f32.gmra.mxu0 %v300
    %v685 = vpop.f32.mrf.mxu0
    %v686 = vadd.f32 %v110, %v685
    %v687 = vpop.f32.mrf.mxu0
    %688 = vmatprep.mubr.f32.mxu0 0.0
    %689 = vmatmul.mubr.f32.gmra.mxu0 %v303
    %v690 = vpop.f32.mrf.mxu0
    %v691 = vadd.f32 %v110, %v690
    %v692 = vpop.f32.mrf.mxu0
    %693 = vdwg.mxu0
    %p694 = scmp.eq.s32.totalorder 0, 0
    // Predicated region
    $region14: #{tpu_custom_call.1} parent=1 // pred_check
      %p695 = pneg %p694
    $region15: #{tpu_custom_call.1} parent=1 // pred_check_branch
      %697 = sbr.rel (%p695) target = $region17
    $region16: #{tpu_custom_call.1} parent=1 // pred_region
      %vm698 = vcmask 57344
      %699 = vst.msk [vmem:[#allocation2] sm:$0x1] %vm698, 0.0
      %700 = vst.msk [vmem:[#allocation4] sm:$0x1] %vm698, 0.0
    $region17: #{tpu_custom_call.1} parent=1 // pred_fallthru
      _
    %v701 = vld [vmem:[#allocation2] sm:$0x1]
    %vm702 = vcmask 64512
    %v703 = vsel %vm702, %v376, 0.0
    %v704 = vsel %vm702, %v381, 0.0
    %v705 = vadd.f32 %v703, %v704
    %v706 = vsel %vm702, %v386, 0.0
    %v707 = vadd.f32 %v705, %v706
    %v708 = vsel %vm702, %v391, 0.0
    %v709 = vadd.f32 %v707, %v708
    %v710 = vsel %vm702, %v396, 0.0
    %v711 = vadd.f32 %v709, %v710
    %v712 = vsel %vm702, %v401, 0.0
    %v713 = vadd.f32 %v711, %v712
    %v714 = vsel %vm702, %v406, 0.0
    %v715 = vadd.f32 %v713, %v714
    %v716 = vsel %vm702, %v411, 0.0
    %v717 = vadd.f32 %v715, %v716
    %v718 = vsel %vm702, %v416, 0.0
    %v719 = vadd.f32 %v717, %v718
    %v720 = vsel %vm702, %v421, 0.0
    %v721 = vadd.f32 %v719, %v720
    %v722 = vsel %vm702, %v426, 0.0
    %v723 = vadd.f32 %v721, %v722
    %v724 = vsel %vm702, %v431, 0.0
    %v725 = vadd.f32 %v723, %v724
    %v726 = vsel %vm702, %v436, 0.0
    %v727 = vadd.f32 %v725, %v726
    %v728 = vsel %vm702, %v441, 0.0
    %v729 = vadd.f32 %v727, %v728
    %v730 = vsel %vm702, %v446, 0.0
    %v731 = vadd.f32 %v729, %v730
    %v732 = vsel %vm702, %v451, 0.0
    %v733 = vadd.f32 %v731, %v732
    %v734 = vsel %vm702, %v456, 0.0
    %v735 = vadd.f32 %v733, %v734
    %v736 = vsel %vm702, %v461, 0.0
    %v737 = vadd.f32 %v735, %v736
    %v738 = vsel %vm702, %v466, 0.0
    %v739 = vadd.f32 %v737, %v738
    %v740 = vsel %vm702, %v471, 0.0
    %v741 = vadd.f32 %v739, %v740
    %v742 = vsel %vm702, %v476, 0.0
    %v743 = vadd.f32 %v741, %v742
    %v744 = vsel %vm702, %v481, 0.0
    %v745 = vadd.f32 %v743, %v744
    %v746 = vsel %vm702, %v486, 0.0
    %v747 = vadd.f32 %v745, %v746
    %v748 = vsel %vm702, %v491, 0.0
    %v749 = vadd.f32 %v747, %v748
    %v750 = vsel %vm702, %v496, 0.0
    %v751 = vadd.f32 %v749, %v750
    %v752 = vsel %vm702, %v501, 0.0
    %v753 = vadd.f32 %v751, %v752
    %v754 = vsel %vm702, %v506, 0.0
    %v755 = vadd.f32 %v753, %v754
    %v756 = vsel %vm702, %v511, 0.0
    %v757 = vadd.f32 %v755, %v756
    %v758 = vsel %vm702, %v516, 0.0
    %v759 = vadd.f32 %v757, %v758
    %v760 = vsel %vm702, %v521, 0.0
    %v761 = vadd.f32 %v759, %v760
    %v762 = vsel %vm702, %v526, 0.0
    %v763 = vadd.f32 %v761, %v762
    %v764 = vsel %vm702, %v531, 0.0
    %v765 = vadd.f32 %v763, %v764
    %v766 = vsel %vm702, %v536, 0.0
    %v767 = vadd.f32 %v765, %v766
    %v768 = vsel %vm702, %v541, 0.0
    %v769 = vadd.f32 %v767, %v768
    %v770 = vsel %vm702, %v546, 0.0
    %v771 = vadd.f32 %v769, %v770
    %v772 = vsel %vm702, %v551, 0.0
    %v773 = vadd.f32 %v771, %v772
    %v774 = vsel %vm702, %v556, 0.0
    %v775 = vadd.f32 %v773, %v774
    %v776 = vsel %vm702, %v561, 0.0
    %v777 = vadd.f32 %v775, %v776
    %v778 = vsel %vm702, %v566, 0.0
    %v779 = vadd.f32 %v777, %v778
    %v780 = vsel %vm702, %v571, 0.0
    %v781 = vadd.f32 %v779, %v780
    %v782 = vsel %vm702, %v576, 0.0
    %v783 = vadd.f32 %v781, %v782
    %v784 = vsel %vm702, %v581, 0.0
    %v785 = vadd.f32 %v783, %v784
    %v786 = vsel %vm702, %v586, 0.0
    %v787 = vadd.f32 %v785, %v786
    %v788 = vsel %vm702, %v591, 0.0
    %v789 = vadd.f32 %v787, %v788
    %v790 = vsel %vm702, %v596, 0.0
    %v791 = vadd.f32 %v789, %v790
    %v792 = vsel %vm702, %v601, 0.0
    %v793 = vadd.f32 %v791, %v792
    %v794 = vsel %vm702, %v606, 0.0
    %v795 = vadd.f32 %v793, %v794
    %v796 = vsel %vm702, %v611, 0.0
    %v797 = vadd.f32 %v795, %v796
    %v798 = vsel %vm702, %v616, 0.0
    %v799 = vadd.f32 %v797, %v798
    %v800 = vsel %vm702, %v621, 0.0
    %v801 = vadd.f32 %v799, %v800
    %v802 = vsel %vm702, %v626, 0.0
    %v803 = vadd.f32 %v801, %v802
    %v804 = vsel %vm702, %v631, 0.0
    %v805 = vadd.f32 %v803, %v804
    %v806 = vsel %vm702, %v636, 0.0
    %v807 = vadd.f32 %v805, %v806
    %v808 = vsel %vm702, %v641, 0.0
    %v809 = vadd.f32 %v807, %v808
    %v810 = vsel %vm702, %v646, 0.0
    %v811 = vadd.f32 %v809, %v810
    %v812 = vsel %vm702, %v651, 0.0
    %v813 = vadd.f32 %v811, %v812
    %v814 = vsel %vm702, %v656, 0.0
    %v815 = vadd.f32 %v813, %v814
    %v816 = vsel %vm702, %v661, 0.0
    %v817 = vadd.f32 %v815, %v816
    %v818 = vsel %vm702, %v666, 0.0
    %v819 = vadd.f32 %v817, %v818
    %v820 = vsel %vm702, %v671, 0.0
    %v821 = vadd.f32 %v819, %v820
    %v822 = vsel %vm702, %v676, 0.0
    %v823 = vadd.f32 %v821, %v822
    %v824 = vsel %vm702, %v681, 0.0
    %v825 = vadd.f32 %v823, %v824
    %v826 = vsel %vm702, %v686, 0.0
    %v827 = vadd.f32 %v825, %v826
    %v828 = vsel %vm702, %v691, 0.0
    %v829 = vadd.f32 %v827, %v828
    %v830 = vrot.slane %v829, 4
    %v831 = vadd.f32 %v829, %v830
    %v832 = vrot.slane %v831, 2
    %v833 = vadd.f32 %v831, %v832
    %v834 = vrot.slane %v833, 1
    %v835 = vadd.f32 %v833, %v834
    %v836 = vadd.f32 %v701, %v835
    %vm837 = vcmask 57344
    %838 = vst.msk [vmem:[#allocation2] sm:$0x1] %vm837, %v836
    %v839 = vld [vmem:[#allocation4] sm:$0x1]
    %v840 = vmul.f32 %v376, %v376
    %v841 = vmul.f32 %v381, %v381
    %v842 = vmul.f32 %v386, %v386
    %v843 = vmul.f32 %v391, %v391
    %v844 = vmul.f32 %v396, %v396
    %v845 = vmul.f32 %v401, %v401
    %v846 = vmul.f32 %v406, %v406
    %v847 = vmul.f32 %v411, %v411
    %v848 = vmul.f32 %v416, %v416
    %v849 = vmul.f32 %v421, %v421
    %v850 = vmul.f32 %v426, %v426
    %v851 = vmul.f32 %v431, %v431
    %v852 = vmul.f32 %v436, %v436
    %v853 = vmul.f32 %v441, %v441
    %v854 = vmul.f32 %v446, %v446
    %v855 = vmul.f32 %v451, %v451
    %v856 = vmul.f32 %v456, %v456
    %v857 = vmul.f32 %v461, %v461
    %v858 = vmul.f32 %v466, %v466
    %v859 = vmul.f32 %v471, %v471
    %v860 = vmul.f32 %v476, %v476
    %v861 = vmul.f32 %v481, %v481
    %v862 = vmul.f32 %v486, %v486
    %v863 = vmul.f32 %v491, %v491
    %v864 = vmul.f32 %v496, %v496
    %v865 = vmul.f32 %v501, %v501
    %v866 = vmul.f32 %v506, %v506
    %v867 = vmul.f32 %v511, %v511
    %v868 = vmul.f32 %v516, %v516
    %v869 = vmul.f32 %v521, %v521
    %v870 = vmul.f32 %v526, %v526
    %v871 = vmul.f32 %v531, %v531
    %v872 = vmul.f32 %v536, %v536
    %v873 = vmul.f32 %v541, %v541
    %v874 = vmul.f32 %v546, %v546
    %v875 = vmul.f32 %v551, %v551
    %v876 = vmul.f32 %v556, %v556
    %v877 = vmul.f32 %v561, %v561
    %v878 = vmul.f32 %v566, %v566
    %v879 = vmul.f32 %v571, %v571
    %v880 = vmul.f32 %v576, %v576
    %v881 = vmul.f32 %v581, %v581
    %v882 = vmul.f32 %v586, %v586
    %v883 = vmul.f32 %v591, %v591
    %v884 = vmul.f32 %v596, %v596
    %v885 = vmul.f32 %v601, %v601
    %v886 = vmul.f32 %v606, %v606
    %v887 = vmul.f32 %v611, %v611
    %v888 = vmul.f32 %v616, %v616
    %v889 = vmul.f32 %v621, %v621
    %v890 = vmul.f32 %v626, %v626
    %v891 = vmul.f32 %v631, %v631
    %v892 = vmul.f32 %v636, %v636
    %v893 = vmul.f32 %v641, %v641
    %v894 = vmul.f32 %v646, %v646
    %v895 = vmul.f32 %v651, %v651
    %v896 = vmul.f32 %v656, %v656
    %v897 = vmul.f32 %v661, %v661
    %v898 = vmul.f32 %v666, %v666
    %v899 = vmul.f32 %v671, %v671
    %v900 = vmul.f32 %v676, %v676
    %v901 = vmul.f32 %v681, %v681
    %v902 = vmul.f32 %v686, %v686
    %v903 = vmul.f32 %v691, %v691
    %v904 = vsel %vm702, %v840, 0.0
    %v905 = vsel %vm702, %v841, 0.0
    %v906 = vadd.f32 %v904, %v905
    %v907 = vsel %vm702, %v842, 0.0
    %v908 = vadd.f32 %v906, %v907
    %v909 = vsel %vm702, %v843, 0.0
    %v910 = vadd.f32 %v908, %v909
    %v911 = vsel %vm702, %v844, 0.0
    %v912 = vadd.f32 %v910, %v911
    %v913 = vsel %vm702, %v845, 0.0
    %v914 = vadd.f32 %v912, %v913
    %v915 = vsel %vm702, %v846, 0.0
    %v916 = vadd.f32 %v914, %v915
    %v917 = vsel %vm702, %v847, 0.0
    %v918 = vadd.f32 %v916, %v917
    %v919 = vsel %vm702, %v848, 0.0
    %v920 = vadd.f32 %v918, %v919
    %v921 = vsel %vm702, %v849, 0.0
    %v922 = vadd.f32 %v920, %v921
    %v923 = vsel %vm702, %v850, 0.0
    %v924 = vadd.f32 %v922, %v923
    %v925 = vsel %vm702, %v851, 0.0
    %v926 = vadd.f32 %v924, %v925
    %v927 = vsel %vm702, %v852, 0.0
    %v928 = vadd.f32 %v926, %v927
    %v929 = vsel %vm702, %v853, 0.0
    %v930 = vadd.f32 %v928, %v929
    %v931 = vsel %vm702, %v854, 0.0
    %v932 = vadd.f32 %v930, %v931
    %v933 = vsel %vm702, %v855, 0.0
    %v934 = vadd.f32 %v932, %v933
    %v935 = vsel %vm702, %v856, 0.0
    %v936 = vadd.f32 %v934, %v935
    %v937 = vsel %vm702, %v857, 0.0
    %v938 = vadd.f32 %v936, %v937
    %v939 = vsel %vm702, %v858, 0.0
    %v940 = vadd.f32 %v938, %v939
    %v941 = vsel %vm702, %v859, 0.0
    %v942 = vadd.f32 %v940, %v941
    %v943 = vsel %vm702, %v860, 0.0
    %v944 = vadd.f32 %v942, %v943
    %v945 = vsel %vm702, %v861, 0.0
    %v946 = vadd.f32 %v944, %v945
    %v947 = vsel %vm702, %v862, 0.0
    %v948 = vadd.f32 %v946, %v947
    %v949 = vsel %vm702, %v863, 0.0
    %v950 = vadd.f32 %v948, %v949
    %v951 = vsel %vm702, %v864, 0.0
    %v952 = vadd.f32 %v950, %v951
    %v953 = vsel %vm702, %v865, 0.0
    %v954 = vadd.f32 %v952, %v953
    %v955 = vsel %vm702, %v866, 0.0
    %v956 = vadd.f32 %v954, %v955
    %v957 = vsel %vm702, %v867, 0.0
    %v958 = vadd.f32 %v956, %v957
    %v959 = vsel %vm702, %v868, 0.0
    %v960 = vadd.f32 %v958, %v959
    %v961 = vsel %vm702, %v869, 0.0
    %v962 = vadd.f32 %v960, %v961
    %v963 = vsel %vm702, %v870, 0.0
    %v964 = vadd.f32 %v962, %v963
    %v965 = vsel %vm702, %v871, 0.0
    %v966 = vadd.f32 %v964, %v965
    %v967 = vsel %vm702, %v872, 0.0
    %v968 = vadd.f32 %v966, %v967
    %v969 = vsel %vm702, %v873, 0.0
    %v970 = vadd.f32 %v968, %v969
    %v971 = vsel %vm702, %v874, 0.0
    %v972 = vadd.f32 %v970, %v971
    %v973 = vsel %vm702, %v875, 0.0
    %v974 = vadd.f32 %v972, %v973
    %v975 = vsel %vm702, %v876, 0.0
    %v976 = vadd.f32 %v974, %v975
    %v977 = vsel %vm702, %v877, 0.0
    %v978 = vadd.f32 %v976, %v977
    %v979 = vsel %vm702, %v878, 0.0
    %v980 = vadd.f32 %v978, %v979
    %v981 = vsel %vm702, %v879, 0.0
    %v982 = vadd.f32 %v980, %v981
    %v983 = vsel %vm702, %v880, 0.0
    %v984 = vadd.f32 %v982, %v983
    %v985 = vsel %vm702, %v881, 0.0
    %v986 = vadd.f32 %v984, %v985
    %v987 = vsel %vm702, %v882, 0.0
    %v988 = vadd.f32 %v986, %v987
    %v989 = vsel %vm702, %v883, 0.0
    %v990 = vadd.f32 %v988, %v989
    %v991 = vsel %vm702, %v884, 0.0
    %v992 = vadd.f32 %v990, %v991
    %v993 = vsel %vm702, %v885, 0.0
    %v994 = vadd.f32 %v992, %v993
    %v995 = vsel %vm702, %v886, 0.0
    %v996 = vadd.f32 %v994, %v995
    %v997 = vsel %vm702, %v887, 0.0
    %v998 = vadd.f32 %v996, %v997
    %v999 = vsel %vm702, %v888, 0.0
    %v1000 = vadd.f32 %v998, %v999
    %v1001 = vsel %vm702, %v889, 0.0
    %v1002 = vadd.f32 %v1000, %v1001
    %v1003 = vsel %vm702, %v890, 0.0
    %v1004 = vadd.f32 %v1002, %v1003
    %v1005 = vsel %vm702, %v891, 0.0
    %v1006 = vadd.f32 %v1004, %v1005
    %v1007 = vsel %vm702, %v892, 0.0
    %v1008 = vadd.f32 %v1006, %v1007
    %v1009 = vsel %vm702, %v893, 0.0
    %v1010 = vadd.f32 %v1008, %v1009
    %v1011 = vsel %vm702, %v894, 0.0
    %v1012 = vadd.f32 %v1010, %v1011
    %v1013 = vsel %vm702, %v895, 0.0
    %v1014 = vadd.f32 %v1012, %v1013
    %v1015 = vsel %vm702, %v896, 0.0
    %v1016 = vadd.f32 %v1014, %v1015
    %v1017 = vsel %vm702, %v897, 0.0
    %v1018 = vadd.f32 %v1016, %v1017
    %v1019 = vsel %vm702, %v898, 0.0
    %v1020 = vadd.f32 %v1018, %v1019
    %v1021 = vsel %vm702, %v899, 0.0
    %v1022 = vadd.f32 %v1020, %v1021
    %v1023 = vsel %vm702, %v900, 0.0
    %v1024 = vadd.f32 %v1022, %v1023
    %v1025 = vsel %vm702, %v901, 0.0
    %v1026 = vadd.f32 %v1024, %v1025
    %v1027 = vsel %vm702, %v902, 0.0
    %v1028 = vadd.f32 %v1026, %v1027
    %v1029 = vsel %vm702, %v903, 0.0
    %v1030 = vadd.f32 %v1028, %v1029
    %v1031 = vrot.slane %v1030, 4
    %v1032 = vadd.f32 %v1030, %v1031
    %v1033 = vrot.slane %v1032, 2
    %v1034 = vadd.f32 %v1032, %v1033
    %v1035 = vrot.slane %v1034, 1
    %v1036 = vadd.f32 %v1034, %v1035
    %v1037 = vadd.f32 %v839, %v1036
    %1038 = vst.msk [vmem:[#allocation4] sm:$0x1] %vm837, %v1037
    // Predicated region
    $region18: #{tpu_custom_call.1} parent=1 // pred_check
      _
    $region19: #{tpu_custom_call.1} parent=1 // pred_check_branch
      %1040 = sbr.rel (0) target = $region21
    $region20: #{tpu_custom_call.1} parent=1 // pred_region
      %s1042 = ssub.s32 16, 16
      %1043 = vsyncadd [#allocation3], %s1042
      %s1045 = sshll.u32 [#allocation2], 4
      %s1046 = int_to_ptr.vmem [resolvable:$true] %s1045
      %1048 = dma.vmem_to_hbm [thread:$0]  %s1046, 16, %s3, [#allocation3]
    $region21: #{tpu_custom_call.1} parent=1 // pred_fallthru
      _
    // Predicated region
    $region22: #{tpu_custom_call.1} parent=1 // pred_check
      _
    $region23: #{tpu_custom_call.1} parent=1 // pred_check_branch
      %1050 = sbr.rel (0) target = $region25
    $region24: #{tpu_custom_call.1} parent=1 // pred_region
      %s1052 = ssub.s32 16, 16
      %1053 = vsyncadd [#allocation5], %s1052
      %s1055 = sshll.u32 [#allocation4], 4
      %s1056 = int_to_ptr.vmem [resolvable:$true] %s1055
      %1058 = dma.vmem_to_hbm [thread:$0]  %s1056, 16, %s4, [#allocation5]
    $region25: #{tpu_custom_call.1} parent=1 // pred_fallthru
      _
    // Predicated region
    $region26: #{tpu_custom_call.1} parent=1 // pred_check
      _
    $region27: #{tpu_custom_call.1} parent=1 // pred_check_branch
      %1060 = sbr.rel (0) target = $region29
    $region28: #{tpu_custom_call.1} parent=1 // pred_region
      %1061 = dma.done [#allocation3], 16
    $region29: #{tpu_custom_call.1} parent=1 // pred_fallthru
      _
    // Predicated region
    $region30: #{tpu_custom_call.1} parent=1 // pred_check
      _
    $region31: #{tpu_custom_call.1} parent=1 // pred_check_branch
      %1063 = sbr.rel (0) target = $region33
    $region32: #{tpu_custom_call.1} parent=1 // pred_region
      %1064 = dma.done [#allocation5], 16
    $region33: #{tpu_custom_call.1} parent=1 // pred_fallthru
      _
    %1065 = vsyncpa [#allocation3], 1
    %1066 = vsyncpa [#allocation5], 1

</llo_original>
